<compile_context>
chip_gen: v6e
topology: v6e:2x2x1
jax: 0.10.0
libtpu: 0.0.40
codegen_flags: <defaults>
</compile_context>

<pallas_src>
import jax
import jax.numpy as jnp
from jax.experimental import pallas as pl
from jax.experimental.pallas import tpu as pltpu

_LANES = 128
_PALLAS_MIN_BYTES = 1 << 20          # below ~1 MiB, XLA's fused sub+mul wins
_TARGET_TILE_BYTES = 4 << 20         # ~4 MiB row tiles (perf review)


def _normalise_kernel(z_ref, mean_ref, inv_std_ref, o_ref):
    # Elementwise hot path on a (tile_rows, L) block:
    #   (z - mean) * (1/std); mean/inv_std are resident (1, L) f32 rows
    # broadcast over the sublane (row) axis.  Math in f32, cast on store.
    z = z_ref[...].astype(jnp.float32)
    o_ref[...] = ((z - mean_ref[...]) * inv_std_ref[...]).astype(o_ref.dtype)


def _choose_tile_rows(rows, lanes, itemsize, target_bytes=_TARGET_TILE_BYTES):
    """Pick ~target_bytes row-tiles, a multiple of 8 sublanes (or full extent)."""
    t = max(1, target_bytes // (itemsize * lanes))
    t = min(t, rows)
    if t < rows:
        t = max(8, (t // 8) * 8)
        t = min(t, rows)
    return int(t)


def _sanitize_tile_rows(tile_rows, rows):
    """Clamp a user-supplied tile_rows to a multiple of 8 (or full extent)."""
    t = min(max(int(tile_rows), 1), rows)
    if t < rows:
        t = max(8, (t // 8) * 8)
        t = min(t, rows)
    return int(t)


def normalise(z, mean, std, *, tile_rows=None, use_pallas=None,
              out_dtype=None, donate_input=False):
    """Apply (z - mean) / std with a Pallas TPU kernel.

    z:    (B, F) float32 (or bfloat16 for reduced-bandwidth streaming)
    mean: (F,)   stats (cast to float32)
    std:  (F,)   stats (cast to float32)
    """
    B, F = z.shape
    out_dtype = z.dtype if out_dtype is None else jnp.dtype(out_dtype)
    mean = jnp.asarray(mean, dtype=jnp.float32)
    std = jnp.asarray(std, dtype=jnp.float32)
    inv_std = 1.0 / std  # exact reciprocal in the wrapper, O(F) work

    if use_pallas is None:
        use_pallas = z.size * z.dtype.itemsize >= _PALLAS_MIN_BYTES
    if not use_pallas:
        # Tiny inputs: pallas_call launch + DMA setup dwarfs ~KiB of data.
        return ((z.astype(jnp.float32) - mean[None, :])
                * inv_std[None, :]).astype(out_dtype)

    # ---- Lane-dense layout plumbing (kernel body is layout-agnostic) ------
    if F % _LANES == 0:
        # Feature dim already lane-aligned: use (B, F) directly.
        mode, rows, L = "direct", B, F
        z2 = z
        mean_row = mean.reshape(1, L)
        inv_row = inv_std.reshape(1, L)
    elif _LANES % F == 0 and (B * F) % _LANES == 0:
        # Flatten (B, F) -> (B*F/128, 128); tile stats to 128 lanes.
        mode, L = "repack", _LANES
        rows = (B * F) // L
        reps = L // F
        z2 = z.reshape(rows, L)
        mean_row = jnp.tile(mean, reps).reshape(1, L)
        inv_row = jnp.tile(inv_std, reps).reshape(1, L)
    else:
        # Pad features up to the next multiple of 128 (mean=0, std=1 in the
        # pad) so stores stay unmasked; slice the pad columns off afterwards.
        mode = "pad"
        L = ((F + _LANES - 1) // _LANES) * _LANES
        pad = L - F
        rows = B
        z2 = jnp.pad(z, ((0, 0), (0, pad)))
        mean_row = jnp.pad(mean, (0, pad)).reshape(1, L)
        inv_row = jnp.pad(inv_std, (0, pad), constant_values=1.0).reshape(1, L)

    if tile_rows is None:
        tile_rows = _choose_tile_rows(rows, L, z2.dtype.itemsize)
    else:
        tile_rows = _sanitize_tile_rows(tile_rows, rows)

    grid = (pl.cdiv(rows, tile_rows),)

    # Explicit scoped-VMEM budget: double-buffered input + output tiles plus
    # headroom, clamped to stay well inside v7x's 64 MiB physical VMEM while
    # covering v5e's 16 MiB scoped default when tiles are ~4 MiB.
    in_tile_bytes = tile_rows * L * z2.dtype.itemsize
    out_tile_bytes = tile_rows * L * jnp.dtype(out_dtype).itemsize
    vmem_need = 2 * (in_tile_bytes + out_tile_bytes) + (1 << 20)
    vmem_limit = int(min(max(vmem_need, 16 << 20), 48 << 20))

    io_aliases = {0: 0} if (donate_input and z2.dtype == out_dtype) else {}

    out2 = pl.pallas_call(
        _normalise_kernel,
        out_shape=jax.ShapeDtypeStruct((rows, L), out_dtype),
        grid_spec=pltpu.PrefetchScalarGridSpec(
            num_scalar_prefetch=0,
            grid=grid,
            in_specs=[
                pl.BlockSpec((tile_rows, L), lambda i: (i, 0)),  # z tile
                pl.BlockSpec((1, L), lambda i: (0, 0)),          # mean (resident)
                pl.BlockSpec((1, L), lambda i: (0, 0)),          # 1/std (resident)
            ],
            out_specs=pl.BlockSpec((tile_rows, L), lambda i: (i, 0)),
        ),
        compiler_params=pltpu.CompilerParams(
            # Rows are independent: shard the grid across TensorCores on
            # megacore parts (no-op on single-TC v5e/v6e).
            dimension_semantics=("parallel",),
            vmem_limit_bytes=vmem_limit,
        ),
        input_output_aliases=io_aliases,
    )(z2, mean_row, inv_row)

    if mode == "repack":
        return out2.reshape(B, F)
    if mode == "pad":
        return out2[:, :F]
    return out2


if __name__ == "__main__":
    key = jax.random.PRNGKey(0)
    k_z, k_m, k_s, k_big, k_odd = jax.random.split(key, 5)

    # Small shape consistent with the module: batch=8, hidden=32.
    B, F = 8, 32
    z = jax.random.normal(k_z, (B, F), dtype=jnp.float32)
    # Deterministic "dataset statistics" parameters (module __init__ args).
    mean = jax.random.normal(k_m, (F,), dtype=jnp.float32) * 0.5
    std = jax.random.uniform(k_s, (F,), dtype=jnp.float32, minval=0.5, maxval=2.0)

    out = jax.block_until_ready(normalise(z, mean, std, use_pallas=True))
    ref = (z - mean[None, :]) / std[None, :]
    assert jnp.allclose(out, ref, atol=1e-5, rtol=1e-5), "mismatch (small)"

    # Larger batch: lane-dense repack + multi-step pipelined grid with the
    # auto-chosen ~4 MiB tiles (no manual tile_rows override).
    B2 = 65536
    z_big = jax.random.normal(k_big, (B2, F), dtype=jnp.float32)
    out_big = jax.block_until_ready(normalise(z_big, mean, std, use_pallas=True))
    ref_big = (z_big - mean[None, :]) / std[None, :]
    assert jnp.allclose(out_big, ref_big, atol=1e-5, rtol=1e-5), "mismatch (large)"

    # Odd feature width (48): exercises the feature-padding path so stores
    # stay full-width unmasked vst instead of the lane-sparse fallback.
    F3, B3 = 48, 64
    z_odd = jax.random.normal(k_odd, (B3, F3), dtype=jnp.float32)
    mean3 = jnp.linspace(-1.0, 1.0, F3, dtype=jnp.float32)
    std3 = jnp.linspace(0.5, 2.0, F3, dtype=jnp.float32)
    out_odd = jax.block_until_ready(normalise(z_odd, mean3, std3, use_pallas=True))
    ref_odd = (z_odd - mean3[None, :]) / std3[None, :]
    assert jnp.allclose(out_odd, ref_odd, atol=1e-5, rtol=1e-5), "mismatch (odd F)"

    # Opt-in bf16 streaming output (math stays f32 in-kernel).
    out_bf16 = jax.block_until_ready(
        normalise(z, mean, std, use_pallas=True, out_dtype=jnp.bfloat16))
    assert jnp.allclose(out_bf16.astype(jnp.float32), ref, atol=5e-2, rtol=2e-2), \
        "mismatch (bf16 out)"

    print("KERNEL_OK")
</pallas_src>

<mosaic_0001>
module attributes {stable_mosaic.version = 11 : i64} {
  func.func @_normalise_kernel(%arg0: i32, %arg1: memref<2x128xf32, #tpu.memory_space<vmem>>, %arg2: memref<1x128xf32, #tpu.memory_space<vmem>>, %arg3: memref<1x128xf32, #tpu.memory_space<vmem>>, %arg4: memref<2x128xf32, #tpu.memory_space<vmem>>) attributes {dimension_semantics = [#tpu.dimension_semantics<parallel>], iteration_bounds = array<i64: 1>, scalar_prefetch = 0 : i64, scratch_operands = 0 : i64, tpu.core_type = #tpu.core_type<tc>, window_params = [{transform_indices = @transform_0, window_bounds = array<i64: 2, 128>}, {pipeline_mode = #tpu.pipeline_mode<synchronous>, transform_indices = @transform_1, window_bounds = array<i64: 1, 128>}, {pipeline_mode = #tpu.pipeline_mode<synchronous>, transform_indices = @transform_2, window_bounds = array<i64: 1, 128>}, {transform_indices = @transform_3, window_bounds = array<i64: 2, 128>}]} {
    %c0 = arith.constant 0 : index
    %c0_0 = arith.constant 0 : index
    %0 = vector.load %arg1[%c0, %c0_0] : memref<2x128xf32, #tpu.memory_space<vmem>>, vector<2x128xf32>
    %c0_1 = arith.constant 0 : index
    %c0_2 = arith.constant 0 : index
    %1 = vector.load %arg2[%c0_1, %c0_2] : memref<1x128xf32, #tpu.memory_space<vmem>>, vector<1x128xf32>
    %2 = vector.broadcast %1 : vector<1x128xf32> to vector<2x128xf32>
    %3 = arith.subf %0, %2 : vector<2x128xf32>
    %c0_3 = arith.constant 0 : index
    %c0_4 = arith.constant 0 : index
    %4 = vector.load %arg3[%c0_3, %c0_4] : memref<1x128xf32, #tpu.memory_space<vmem>>, vector<1x128xf32>
    %5 = vector.broadcast %4 : vector<1x128xf32> to vector<2x128xf32>
    %6 = arith.mulf %3, %5 : vector<2x128xf32>
    %c0_5 = arith.constant 0 : index
    %c0_6 = arith.constant 0 : index
    %7 = vector.load %arg4[%c0_5, %c0_6] : memref<2x128xf32, #tpu.memory_space<vmem>>, vector<2x128xf32>
    tpu.vector_store %arg4[%c0_5, %c0_6], %6 {strides = array<i32>} : memref<2x128xf32, #tpu.memory_space<vmem>>, vector<2x128xf32>,
    return
  }
  func.func @transform_0(%arg0: i32) -> (i32, i32) {
    %c0_i32 = arith.constant 0 : i32
    %c0_i32_0 = arith.constant 0 : i32
    return %arg0, %c0_i32 : i32, i32
  }
  func.func @transform_1(%arg0: i32) -> (i32, i32) {
    %c0_i32 = arith.constant 0 : i32
    %c0_i32_0 = arith.constant 0 : i32
    %c0_i32_1 = arith.constant 0 : i32
    return %c0_i32, %c0_i32_0 : i32, i32
  }
  func.func @transform_2(%arg0: i32) -> (i32, i32) {
    %c0_i32 = arith.constant 0 : i32
    %c0_i32_0 = arith.constant 0 : i32
    %c0_i32_1 = arith.constant 0 : i32
    return %c0_i32, %c0_i32_0 : i32, i32
  }
  func.func @transform_3(%arg0: i32) -> (i32, i32) {
    %c0_i32 = arith.constant 0 : i32
    %c0_i32_0 = arith.constant 0 : i32
    return %arg0, %c0_i32 : i32, i32
  }
}

</mosaic_0001>

<llo_original>
// kernel: tpu_custom_call.1
$region0: #{tpu_custom_call.1}
  #allocation0 [shape = 'u32[]', space=smem, size = 0x4, offset = 0x4, fixed_abs, tag = 'smem constant byte address 0x4 - core index']
  #allocation1 [shape = 'u32[144,128]{1,0:T(1,128)}', space=vmem, size = 0x12000, scoped, tag = 'internal scratch']
  %s0 = inlined_call_operand.hbm [shape: f32[2,128], index: 0, kind: input, shape index: {}]
  %s1 = inlined_call_operand.vmem [shape: f32[1,128], index: 1, kind: input, shape index: {}]
  %s2 = inlined_call_operand.vmem [shape: f32[1,128], index: 2, kind: input, shape index: {}]
  %s3 = inlined_call_operand.hbm [shape: f32[2,128], index: 3, kind: output, shape index: {}]
  %s4 = sld [smem:[#allocation0]]
  $region26: #{tpu_custom_call.1} parent=0
    _
  %s6 = ssub.s32 1, %s4
  %s7 = scalar_select 0, %s6, %s4
  $region1: #{tpu_custom_call.1} parent=0
    #allocation2 [shape = 'u8[1024]{0}', space=vmem, size = 0x400, scoped, tag = 'input window, operand 0, single buffered']
    #allocation3 [shape = 's32[1]{0}', space=sflag, size = 0x4, scoped, tag = 'scoped memory for tpu_custom_call.1']
    #allocation4 [shape = 's32[1]{0}', space=sflag, size = 0x4, scoped, tag = 'scoped memory for tpu_custom_call.1']
    #allocation5 [shape = 'u8[1024]{0}', space=vmem, size = 0x400, scoped, tag = 'output window, operand 0, single buffered']
    %8 = vsyncpa [#allocation3], 0
    %9 = vsyncpa [#allocation4], 0
    // Predicated region
    $region2: #{tpu_custom_call.1} parent=1 // pred_check
      _
    $region3: #{tpu_custom_call.1} parent=1 // pred_check_branch
      %11 = sbr.rel (0) target = $region5
    $region4: #{tpu_custom_call.1} parent=1 // pred_region
      %s13 = ssub.s32 32, 32
      %14 = vsyncadd [#allocation3], %s13
      %s16 = sshll.u32 [#allocation2], 4
      %s17 = int_to_ptr.vmem [resolvable:$true] %s16
      %19 = dma.hbm_to_vmem [thread:$0]  %s0, 32, %s17, [#allocation3]
    $region5: #{tpu_custom_call.1} parent=1 // pred_fallthru
      _
    // Predicated region
    $region6: #{tpu_custom_call.1} parent=1 // pred_check
      _
    $region7: #{tpu_custom_call.1} parent=1 // pred_check_branch
      %21 = sbr.rel (0) target = $region9
    $region8: #{tpu_custom_call.1} parent=1 // pred_region
      _
    $region9: #{tpu_custom_call.1} parent=1 // pred_fallthru
      _
    // Predicated region
    $region10: #{tpu_custom_call.1} parent=1 // pred_check
      _
    $region11: #{tpu_custom_call.1} parent=1 // pred_check_branch
      %23 = sbr.rel (0) target = $region13
    $region12: #{tpu_custom_call.1} parent=1 // pred_region
      _
    $region13: #{tpu_custom_call.1} parent=1 // pred_fallthru
      _
    // Predicated region
    $region14: #{tpu_custom_call.1} parent=1 // pred_check
      _
    $region15: #{tpu_custom_call.1} parent=1 // pred_check_branch
      %25 = sbr.rel (0) target = $region17
    $region16: #{tpu_custom_call.1} parent=1 // pred_region
      %26 = dma.done [#allocation3], 32
    $region17: #{tpu_custom_call.1} parent=1 // pred_fallthru
      _
    %v27 = vld [vmem:[#allocation2] sm:$0x3]
    %v28 = vld [vmem:[%s1] sm:$0x1]
    %v30 = vlaneseq
    %v31 = vshrl.u32 %v30, 7
    %v32 = vsub.s32 0, %v31
    %v33 = vrot.slane %v28, %v32
    %v35 = vsub.f32 %v27, %v33
    %v36 = vld [vmem:[%s2] sm:$0x1]
    %v38 = vlaneseq
    %v39 = vshrl.u32 %v38, 7
    %v40 = vsub.s32 0, %v39
    %v41 = vrot.slane %v36, %v40
    %v43 = vmul.f32 %v35, %v41
    %44 = vst [vmem:[#allocation5] sm:$0x3] %v43
    // Predicated region
    $region18: #{tpu_custom_call.1} parent=1 // pred_check
      _
    $region19: #{tpu_custom_call.1} parent=1 // pred_check_branch
      %46 = sbr.rel (0) target = $region21
    $region20: #{tpu_custom_call.1} parent=1 // pred_region
      %s48 = ssub.s32 32, 32
      %49 = vsyncadd [#allocation4], %s48
      %s51 = sshll.u32 [#allocation5], 4
      %s52 = int_to_ptr.vmem [resolvable:$true] %s51
      %54 = dma.vmem_to_hbm [thread:$0]  %s52, 32, %s3, [#allocation4]
    $region21: #{tpu_custom_call.1} parent=1 // pred_fallthru
      _
    // Predicated region
    $region22: #{tpu_custom_call.1} parent=1 // pred_check
      _
    $region23: #{tpu_custom_call.1} parent=1 // pred_check_branch
      %56 = sbr.rel (0) target = $region25
    $region24: #{tpu_custom_call.1} parent=1 // pred_region
      %57 = dma.done [#allocation4], 32
    $region25: #{tpu_custom_call.1} parent=1 // pred_fallthru
      _
    %58 = vsyncpa [#allocation3], 1
    %59 = vsyncpa [#allocation4], 1

</llo_original>
